<compile_context>
chip_gen: v6e
topology: v6e:2x2x1
jax: 0.10.0
libtpu: 0.0.40
codegen_flags: <defaults>
</compile_context>

<pallas_src>
import jax
import jax.numpy as jnp
import numpy as np
from jax.experimental import pallas as pl
from jax.experimental.pallas import tpu as pltpu

# -----------------------------------------------------------------------------
# Model configuration (scaled-down, deterministic synthetic weights)
# -----------------------------------------------------------------------------
TARGET_CONFIGS = {"themes": 27, "objectives": 9, "zones": 3, "areas": 17}
HIDDEN_SIZE = 128         # stand-in for SciBERT hidden_size (=768); lane-dense (128)
SHARED_DIM = 64           # stand-in for shared_dim (=256); 4*(64//2)=128 lane-dense
HALF_DIM = SHARED_DIM // 2
HEAD_CAT = len(TARGET_CONFIGS) * HALF_DIM   # fused first-layer width (=128 here)
VOCAB_SIZE = 128          # synthetic vocabulary
BATCH = 2
SEQ = 8

DEFAULT_BATCH_TILE = 256  # 128-512 rows/step amortizes ~0.35us step overhead & feeds the MXU
LOGIT_PAD = 128           # lane-dense padded width for the fused logits output

# lane offsets of each target inside the fused [*, LOGIT_PAD] logits buffer
_TARGET_OFFSETS = {}
_off = 0
for _name, _nc in TARGET_CONFIGS.items():
    _TARGET_OFFSETS[_name] = _off
    _off += _nc
TOTAL_CLASSES = _off  # 56
assert TOTAL_CLASSES <= LOGIT_PAD


def _round_up(x, m):
    return (x + m - 1) // m * m


def _xavier_uniform(key, shape, dtype=jnp.float32):
    fan_in, fan_out = shape[0], shape[1]
    limit = float(np.sqrt(6.0 / (fan_in + fan_out)))
    return jax.random.uniform(key, shape, dtype, minval=-limit, maxval=limit)


def init_params(key):
    """Deterministic parameter init mirroring _init_weights (xavier_uniform, zero bias)."""
    n_targets = len(TARGET_CONFIGS)
    keys = jax.random.split(key, 2 + 2 * n_targets)
    params = {}
    # Synthetic "base model": token embedding table (stand-in for SciBERT encoder).
    params["tok_emb"] = (
        jax.random.normal(keys[0], (VOCAB_SIZE, HIDDEN_SIZE), jnp.float32) * 0.02
    )
    # shared_projection: Linear(hidden_size, shared_dim)
    params["w_proj"] = _xavier_uniform(keys[1], (HIDDEN_SIZE, SHARED_DIM))
    params["b_proj"] = jnp.zeros((1, SHARED_DIM), jnp.float32)
    # classifiers[target]: Linear(shared_dim, shared_dim//2) -> ReLU -> Dropout
    #                      -> Linear(shared_dim//2, num_classes)
    for i, (name, num_classes) in enumerate(TARGET_CONFIGS.items()):
        k1, k2 = keys[2 + 2 * i], keys[3 + 2 * i]
        params[f"{name}_w1"] = _xavier_uniform(k1, (SHARED_DIM, HALF_DIM))
        params[f"{name}_b1"] = jnp.zeros((1, HALF_DIM), jnp.float32)
        params[f"{name}_w2"] = _xavier_uniform(k2, (HALF_DIM, num_classes))
        params[f"{name}_b2"] = jnp.zeros((1, num_classes), jnp.float32)
    return params


# -----------------------------------------------------------------------------
# Fused-weight construction — built ONCE per weight update (hoisted out of the
# per-forward path so the concats / block-diagonal scatters never run per call).
# -----------------------------------------------------------------------------
def prepare_fused_params(params, mxu_dtype=jnp.bfloat16):
    """Fuse the shared projection + 4 classifier heads into 2 lane-dense matmuls.

    Exact algebra (dropout = identity in eval; no nonlinearity between the shared
    projection and the heads' first Linear):
        relu((x @ Wp + bp) @ W1 + b1) = relu(x @ (Wp @ W1) + (bp @ W1 + b1))
    Returns:
      w1 [H, HEAD_CAT]        fused projection + first-layer weights (MXU dtype)
      b1 [1, HEAD_CAT]        folded first-layer bias (f32)
      w2 [HEAD_CAT, LOGIT_PAD] block-diagonal second-layer weights (MXU dtype)
      b2 [1, LOGIT_PAD]       concatenated, zero-padded second-layer bias (f32)
    """
    names = list(TARGET_CONFIGS.keys())
    w1_cat = jnp.concatenate([params[f"{m}_w1"] for m in names], axis=1)  # [S, HEAD_CAT]
    b1_cat = jnp.concatenate([params[f"{m}_b1"] for m in names], axis=1)  # [1, HEAD_CAT]
    w2_bd = jnp.zeros((HEAD_CAT, LOGIT_PAD), jnp.float32)
    b2_cat = jnp.zeros((1, LOGIT_PAD), jnp.float32)
    for t, m in enumerate(names):
        off, nc = _TARGET_OFFSETS[m], TARGET_CONFIGS[m]
        w2_bd = w2_bd.at[t * HALF_DIM:(t + 1) * HALF_DIM, off:off + nc].set(
            params[f"{m}_w2"])
        b2_cat = b2_cat.at[:, off:off + nc].set(params[f"{m}_b2"])
    # Fold the shared projection (computed in f32, then cast the MXU operands).
    w1_fused = params["w_proj"] @ w1_cat                    # [H, HEAD_CAT]
    b1_fused = params["b_proj"] @ w1_cat + b1_cat           # [1, HEAD_CAT]
    return {
        "w1": w1_fused.astype(mxu_dtype),   # MXU operand (bf16 on v6e/v7x)
        "b1": b1_fused.astype(jnp.float32),  # bias/ReLU stay f32 (v5e: no bf16 VPU)
        "w2": w2_bd.astype(mxu_dtype),
        "b2": b2_cat.astype(jnp.float32),
    }


# -----------------------------------------------------------------------------
# Pallas kernel: 2 fused MXU matmuls cover the shared projection + all 4 heads.
# (CLS pooling already done in the wrapper; only [tile_b, H] enters the kernel.)
# -----------------------------------------------------------------------------
def _fused_head_kernel(cls_ref, w1_ref, b1_ref, w2_ref, b2_ref, out_ref):
    # [tb, H] @ [H, HEAD_CAT] — shared projection folded into the head layer-1 weights
    h = jnp.dot(cls_ref[...], w1_ref[...], preferred_element_type=jnp.float32)
    h = jnp.maximum(h + b1_ref[...], 0.0)                       # f32 bias-add + ReLU
    # [tb, HEAD_CAT] @ [HEAD_CAT, 128] block-diagonal layer-2 -> lane-dense 128-wide store
    logits = jnp.dot(h.astype(w2_ref.dtype), w2_ref[...],
                     preferred_element_type=jnp.float32) + b2_ref[...]
    out_ref[...] = logits.astype(out_ref.dtype)


def _choose_tile(batch, requested):
    """Pick a batch tile: large (amortizes step overhead, feeds MXU), clamped to the
    padded batch, and — when there is enough work — keeping >=2 grid steps so the
    'parallel' axis actually splits across v7x's two TensorCores."""
    b_pad8 = _round_up(batch, 8)                 # f32/bf16 sublane granule
    tile = min(requested, b_pad8)
    if b_pad8 // tile < 2 and b_pad8 >= 16:
        tile = max(8, (b_pad8 // 2) // 8 * 8)
    return tile, _round_up(batch, tile)


def multi_target_heads(last_hidden_state, fused, *, tile_b=DEFAULT_BATCH_TILE):
    """Runs the fused head kernel. Returns dict {target: [B, num_classes] logits}."""
    # CLS pooling in the wrapper: only the [B, H] slab is DMA'd into VMEM.
    cls = last_hidden_state[:, 0, :]                                    # [B, H]
    B, H = cls.shape
    tile_b, b_pad = _choose_tile(B, tile_b)

    mxu_dtype = fused["w1"].dtype
    cls = cls.astype(mxu_dtype)
    if b_pad != B:
        # TODO(synk): the full [B,T,H] tensor could instead be fed with a
        # (tile_b, squeezed, H) BlockSpec and a partial last block to skip this
        # pad copy; modest win at these sizes, kept simple for robustness.
        cls = jnp.pad(cls, ((0, b_pad - B), (0, 0)))

    hc = fused["w1"].shape[1]                                           # HEAD_CAT
    grid = (b_pad // tile_b,)

    def _full(arr):
        # whole-array resident block, same block index for every grid step
        return pl.BlockSpec(arr.shape, lambda i: (0, 0))

    dsz = jnp.dtype(mxu_dtype).itemsize
    flops = 2 * b_pad * (H * hc + hc * LOGIT_PAD)
    bytes_accessed = (
        b_pad * H * dsz                       # CLS rows (bf16/f32)
        + H * hc * dsz + hc * LOGIT_PAD * dsz  # fused weights
        + 4 * (hc + LOGIT_PAD)                 # biases (f32)
        + 4 * b_pad * LOGIT_PAD                # logits out (f32)
    )

    fused_logits = pl.pallas_call(
        _fused_head_kernel,
        out_shape=jax.ShapeDtypeStruct((b_pad, LOGIT_PAD), jnp.float32),
        grid=grid,
        in_specs=[
            pl.BlockSpec((tile_b, H), lambda i: (i, 0)),                # CLS rows
            _full(fused["w1"]),
            _full(fused["b1"]),
            _full(fused["w2"]),
            _full(fused["b2"]),
        ],
        out_specs=pl.BlockSpec((tile_b, LOGIT_PAD), lambda i: (i, 0)),
        compiler_params=pltpu.CompilerParams(
            dimension_semantics=("parallel",),
            # VMEM: 2x(tile_b*H*dsz) input + 2x(tile_b*128*4) output buffers +
            # resident fused weights.  At tile_b=256, H=768, bf16 this is ~2 MB —
            # far under v7x's 64 MiB physical / 32 MiB scoped default.
            vmem_limit_bytes=32 * 1024 * 1024,
        ),
        cost_estimate=pl.CostEstimate(
            flops=flops, transcendentals=0, bytes_accessed=bytes_accessed
        ),
    )(cls, fused["w1"], fused["b1"], fused["w2"], fused["b2"])

    # Split the single lane-dense buffer into the per-target logits dict.
    return {
        name: fused_logits[:B, _TARGET_OFFSETS[name]:
                               _TARGET_OFFSETS[name] + TARGET_CONFIGS[name]]
        for name in TARGET_CONFIGS
    }


# -----------------------------------------------------------------------------
# Full forward: synthetic "base model" (embedding lookup) + Pallas head kernel
# -----------------------------------------------------------------------------
def forward(input_ids, attention_mask, params, fused):
    # TODO(synk): the pretrained SciBERT transformer encoder (12-layer BERT with a
    # checkpoint) has no in-script equivalent; a deterministic token-embedding
    # lookup stands in for `base_model(...).last_hidden_state`.
    last_hidden_state = params["tok_emb"][input_ids]          # [B, T, H]
    del attention_mask  # only consumed by the (stand-in) encoder
    return multi_target_heads(last_hidden_state, fused)


# Pure-JAX reference for the head math (un-fused, same semantics as the module).
def forward_ref(input_ids, params):
    hidden = params["tok_emb"][input_ids]
    pooled = hidden[:, 0, :]
    shared = pooled @ params["w_proj"] + params["b_proj"]
    out = {}
    for name in TARGET_CONFIGS:
        h = jnp.maximum(shared @ params[f"{name}_w1"] + params[f"{name}_b1"], 0.0)
        out[name] = h @ params[f"{name}_w2"] + params[f"{name}_b2"]
    return out


if __name__ == "__main__":
    key = jax.random.PRNGKey(0)
    k_params, k_ids = jax.random.split(key)

    params = init_params(k_params)
    input_ids = jax.random.randint(k_ids, (BATCH, SEQ), 0, VOCAB_SIZE, dtype=jnp.int32)
    attention_mask = jnp.ones((BATCH, SEQ), jnp.int32)

    ref = forward_ref(input_ids, params)
    fwd = jax.jit(forward)

    # f32 MXU operands: exact-path check (tight tolerance).
    fused_f32 = prepare_fused_params(params, mxu_dtype=jnp.float32)
    preds_f32 = fwd(input_ids, attention_mask, params, fused_f32)
    preds_f32 = jax.tree_util.tree_map(jax.block_until_ready, preds_f32)
    for name in TARGET_CONFIGS:
        assert preds_f32[name].shape == (BATCH, TARGET_CONFIGS[name])
        np.testing.assert_allclose(
            np.asarray(preds_f32[name]), np.asarray(ref[name]), rtol=1e-5, atol=2e-4
        )

    # bf16 MXU operands (v6e/v7x fast path, f32 accumulation): looser tolerance.
    fused_bf16 = prepare_fused_params(params, mxu_dtype=jnp.bfloat16)
    preds_bf16 = fwd(input_ids, attention_mask, params, fused_bf16)
    preds_bf16 = jax.tree_util.tree_map(jax.block_until_ready, preds_bf16)
    for name in TARGET_CONFIGS:
        assert preds_bf16[name].shape == (BATCH, TARGET_CONFIGS[name])
        np.testing.assert_allclose(
            np.asarray(preds_bf16[name]), np.asarray(ref[name]), rtol=2e-2, atol=2e-2
        )

    print("KERNEL_OK")
</pallas_src>

<mosaic_0001>
module attributes {stable_mosaic.version = 11 : i64} {
  func.func @_fused_head_kernel(%arg0: i32, %arg1: memref<8x128xf32, #tpu.memory_space<vmem>>, %arg2: memref<128x128xf32, #tpu.memory_space<vmem>>, %arg3: memref<1x128xf32, #tpu.memory_space<vmem>>, %arg4: memref<128x128xf32, #tpu.memory_space<vmem>>, %arg5: memref<1x128xf32, #tpu.memory_space<vmem>>, %arg6: memref<8x128xf32, #tpu.memory_space<vmem>>) attributes {dimension_semantics = [#tpu.dimension_semantics<parallel>], iteration_bounds = array<i64: 1>, scalar_prefetch = 0 : i64, scratch_operands = 0 : i64, tpu.core_type = #tpu.core_type<tc>, window_params = [{transform_indices = @transform_0, window_bounds = array<i64: 8, 128>}, {pipeline_mode = #tpu.pipeline_mode<synchronous>, transform_indices = @transform_1, window_bounds = array<i64: 128, 128>}, {pipeline_mode = #tpu.pipeline_mode<synchronous>, transform_indices = @transform_2, window_bounds = array<i64: 1, 128>}, {pipeline_mode = #tpu.pipeline_mode<synchronous>, transform_indices = @transform_3, window_bounds = array<i64: 128, 128>}, {pipeline_mode = #tpu.pipeline_mode<synchronous>, transform_indices = @transform_4, window_bounds = array<i64: 1, 128>}, {transform_indices = @transform_5, window_bounds = array<i64: 8, 128>}]} {
    %c0 = arith.constant 0 : index
    %c0_0 = arith.constant 0 : index
    %0 = vector.load %arg1[%c0, %c0_0] : memref<8x128xf32, #tpu.memory_space<vmem>>, vector<8x128xf32>
    %c0_1 = arith.constant 0 : index
    %c0_2 = arith.constant 0 : index
    %1 = vector.load %arg2[%c0_1, %c0_2] : memref<128x128xf32, #tpu.memory_space<vmem>>, vector<128x128xf32>
    %cst = arith.constant dense<0.000000e+00> : vector<8x128xf32>
    %2 = tpu.matmul %0, %1, %cst {dimension_numbers = #tpu.dot_dimension_numbers<[1], [0], [0], [1], [0, 0, 1, 1], [], []>} : vector<8x128xf32>, vector<128x128xf32>, vector<8x128xf32> -> vector<8x128xf32>
    %c0_3 = arith.constant 0 : index
    %c0_4 = arith.constant 0 : index
    %3 = vector.load %arg3[%c0_3, %c0_4] : memref<1x128xf32, #tpu.memory_space<vmem>>, vector<1x128xf32>
    %4 = vector.broadcast %3 : vector<1x128xf32> to vector<8x128xf32>
    %5 = arith.addf %2, %4 : vector<8x128xf32>
    %cst_5 = arith.constant 0.000000e+00 : f32
    %6 = vector.broadcast %cst_5 : f32 to vector<8x128xf32>
    %7 = arith.maximumf %5, %6 : vector<8x128xf32>
    %c0_6 = arith.constant 0 : index
    %c0_7 = arith.constant 0 : index
    %8 = vector.load %arg4[%c0_6, %c0_7] : memref<128x128xf32, #tpu.memory_space<vmem>>, vector<128x128xf32>
    %cst_8 = arith.constant dense<0.000000e+00> : vector<8x128xf32>
    %9 = tpu.matmul %7, %8, %cst_8 {dimension_numbers = #tpu.dot_dimension_numbers<[1], [0], [0], [1], [0, 0, 1, 1], [], []>} : vector<8x128xf32>, vector<128x128xf32>, vector<8x128xf32> -> vector<8x128xf32>
    %c0_9 = arith.constant 0 : index
    %c0_10 = arith.constant 0 : index
    %10 = vector.load %arg5[%c0_9, %c0_10] : memref<1x128xf32, #tpu.memory_space<vmem>>, vector<1x128xf32>
    %11 = vector.broadcast %10 : vector<1x128xf32> to vector<8x128xf32>
    %12 = arith.addf %9, %11 : vector<8x128xf32>
    %c0_11 = arith.constant 0 : index
    %c0_12 = arith.constant 0 : index
    %13 = vector.load %arg6[%c0_11, %c0_12] : memref<8x128xf32, #tpu.memory_space<vmem>>, vector<8x128xf32>
    tpu.vector_store %arg6[%c0_11, %c0_12], %12 {strides = array<i32>} : memref<8x128xf32, #tpu.memory_space<vmem>>, vector<8x128xf32>,
    return
  }
  func.func @transform_0(%arg0: i32) -> (i32, i32) {
    %c0_i32 = arith.constant 0 : i32
    %c0_i32_0 = arith.constant 0 : i32
    return %arg0, %c0_i32 : i32, i32
  }
  func.func @transform_1(%arg0: i32) -> (i32, i32) {
    %c0_i32 = arith.constant 0 : i32
    %c0_i32_0 = arith.constant 0 : i32
    %c0_i32_1 = arith.constant 0 : i32
    return %c0_i32, %c0_i32_0 : i32, i32
  }
  func.func @transform_2(%arg0: i32) -> (i32, i32) {
    %c0_i32 = arith.constant 0 : i32
    %c0_i32_0 = arith.constant 0 : i32
    %c0_i32_1 = arith.constant 0 : i32
    return %c0_i32, %c0_i32_0 : i32, i32
  }
  func.func @transform_3(%arg0: i32) -> (i32, i32) {
    %c0_i32 = arith.constant 0 : i32
    %c0_i32_0 = arith.constant 0 : i32
    %c0_i32_1 = arith.constant 0 : i32
    return %c0_i32, %c0_i32_0 : i32, i32
  }
  func.func @transform_4(%arg0: i32) -> (i32, i32) {
    %c0_i32 = arith.constant 0 : i32
    %c0_i32_0 = arith.constant 0 : i32
    %c0_i32_1 = arith.constant 0 : i32
    return %c0_i32, %c0_i32_0 : i32, i32
  }
  func.func @transform_5(%arg0: i32) -> (i32, i32) {
    %c0_i32 = arith.constant 0 : i32
    %c0_i32_0 = arith.constant 0 : i32
    return %arg0, %c0_i32 : i32, i32
  }
}

</mosaic_0001>

<llo_original>
// kernel: forward.1
$region0: #{forward.1}
  #allocation0 [shape = 'u32[]', space=smem, size = 0x4, offset = 0x4, fixed_abs, tag = 'smem constant byte address 0x4 - core index']
  #allocation1 [shape = 'u32[144,128]{1,0:T(1,128)}', space=vmem, size = 0x12000, scoped, tag = 'internal scratch']
  %s0 = inlined_call_operand.vmem [shape: f32[8,128], index: 0, kind: input, shape index: {}]
  %s1 = inlined_call_operand.vmem [shape: f32[128,128], index: 1, kind: input, shape index: {}]
  %s2 = inlined_call_operand.vmem [shape: f32[1,128], index: 2, kind: input, shape index: {}]
  %s3 = inlined_call_operand.hbm [shape: f32[128,128], index: 3, kind: input, shape index: {}]
  %s4 = inlined_call_operand.vmem [shape: f32[1,128], index: 4, kind: input, shape index: {}]
  %s5 = inlined_call_operand.vmem [shape: f32[8,128], index: 5, kind: output, shape index: {}]
  %s6 = sld [smem:[#allocation0]]
  $region34: #{forward.1} parent=0
    _
  %s8 = ssub.s32 1, %s6
  %s9 = scalar_select 0, %s8, %s6
  $region1: #{forward.1} parent=0
    #allocation2 [shape = 'u8[65536]{0}', space=vmem, size = 0x10000, scoped, tag = 'input window, operand 3, single buffered']
    #allocation3 [shape = 's32[1]{0}', space=sflag, size = 0x4, scoped, tag = 'scoped memory for forward.1']
    %10 = vsyncpa [#allocation3], 0
    // Predicated region
    $region2: #{forward.1} parent=1 // pred_check
      _
    $region3: #{forward.1} parent=1 // pred_check_branch
      %12 = sbr.rel (0) target = $region5
    $region4: #{forward.1} parent=1 // pred_region
      _
    $region5: #{forward.1} parent=1 // pred_fallthru
      _
    // Predicated region
    $region6: #{forward.1} parent=1 // pred_check
      _
    $region7: #{forward.1} parent=1 // pred_check_branch
      %14 = sbr.rel (0) target = $region9
    $region8: #{forward.1} parent=1 // pred_region
      _
    $region9: #{forward.1} parent=1 // pred_fallthru
      _
    // Predicated region
    $region10: #{forward.1} parent=1 // pred_check
      _
    $region11: #{forward.1} parent=1 // pred_check_branch
      %16 = sbr.rel (0) target = $region13
    $region12: #{forward.1} parent=1 // pred_region
      _
    $region13: #{forward.1} parent=1 // pred_fallthru
      _
    // Predicated region
    $region14: #{forward.1} parent=1 // pred_check
      _
    $region15: #{forward.1} parent=1 // pred_check_branch
      %18 = sbr.rel (0) target = $region17
    $region16: #{forward.1} parent=1 // pred_region
      %s20 = ssub.s32 2048, 2048
      %21 = vsyncadd [#allocation3], %s20
      %s22 = sshll.u32 [#allocation2], 4
      %s23 = int_to_ptr.vmem [resolvable:$true] %s22
      %28 = dma.hbm_to_vmem [thread:$0]  %s3, 2048, %s23, [#allocation3], 128, 128, 8
    $region17: #{forward.1} parent=1 // pred_fallthru
      _
    // Predicated region
    $region18: #{forward.1} parent=1 // pred_check
      _
    $region19: #{forward.1} parent=1 // pred_check_branch
      %30 = sbr.rel (0) target = $region21
    $region20: #{forward.1} parent=1 // pred_region
      _
    $region21: #{forward.1} parent=1 // pred_fallthru
      _
    // Predicated region
    $region22: #{forward.1} parent=1 // pred_check
      _
    $region23: #{forward.1} parent=1 // pred_check_branch
      %32 = sbr.rel (0) target = $region25
    $region24: #{forward.1} parent=1 // pred_region
      %33 = dma.done [#allocation3], 2048
    $region25: #{forward.1} parent=1 // pred_fallthru
      _
    %v34 = vld [vmem:[%s0] sm:$0xff]
    %v35 = vld [vmem:[%s1] sm:$0xff]
    %v36 = vld [vmem:[%s1 + $0x8] sm:$0xff]
    %v37 = vld [vmem:[%s1 + $0x10] sm:$0xff]
    %v38 = vld [vmem:[%s1 + $0x18] sm:$0xff]
    %v39 = vld [vmem:[%s1 + $0x20] sm:$0xff]
    %v40 = vld [vmem:[%s1 + $0x28] sm:$0xff]
    %v41 = vld [vmem:[%s1 + $0x30] sm:$0xff]
    %v42 = vld [vmem:[%s1 + $0x38] sm:$0xff]
    %v43 = vld [vmem:[%s1 + $0x40] sm:$0xff]
    %v44 = vld [vmem:[%s1 + $0x48] sm:$0xff]
    %v45 = vld [vmem:[%s1 + $0x50] sm:$0xff]
    %v46 = vld [vmem:[%s1 + $0x58] sm:$0xff]
    %v47 = vld [vmem:[%s1 + $0x60] sm:$0xff]
    %v48 = vld [vmem:[%s1 + $0x68] sm:$0xff]
    %v49 = vld [vmem:[%s1 + $0x70] sm:$0xff]
    %v50 = vld [vmem:[%s1 + $0x78] sm:$0xff]
    %v51 = vld [vmem:[%s2] sm:$0x1]
    %v53 = vlaneseq
    %v54 = vshrl.u32 %v53, 7
    %v55 = vsub.s32 0, %v54
    %v56 = vrot.slane %v51, %v55
    %58 = vmatprep.subr.mxu0 0.0
    %59 = vmatpush1.msra.mxu0 %v50
    %60 = vmatprep.subr.mxu0 0.0
    %61 = vmatpush1.msra.mxu0 %v49
    %62 = vmatprep.subr.mxu0 0.0
    %63 = vmatpush1.msra.mxu0 %v48
    %64 = vmatprep.subr.mxu0 0.0
    %65 = vmatpush1.msra.mxu0 %v47
    %66 = vmatprep.subr.mxu0 0.0
    %67 = vmatpush1.msra.mxu0 %v46
    %68 = vmatprep.subr.mxu0 0.0
    %69 = vmatpush1.msra.mxu0 %v45
    %70 = vmatprep.subr.mxu0 0.0
    %71 = vmatpush1.msra.mxu0 %v44
    %72 = vmatprep.subr.mxu0 0.0
    %73 = vmatpush1.msra.mxu0 %v43
    %74 = vmatprep.subr.mxu0 0.0
    %75 = vmatpush1.msra.mxu0 %v42
    %76 = vmatprep.subr.mxu0 0.0
    %77 = vmatpush1.msra.mxu0 %v41
    %78 = vmatprep.subr.mxu0 0.0
    %79 = vmatpush1.msra.mxu0 %v40
    %80 = vmatprep.subr.mxu0 0.0
    %81 = vmatpush1.msra.mxu0 %v39
    %82 = vmatprep.subr.mxu0 0.0
    %83 = vmatpush1.msra.mxu0 %v38
    %84 = vmatprep.subr.mxu0 0.0
    %85 = vmatpush1.msra.mxu0 %v37
    %86 = vmatprep.subr.mxu0 0.0
    %87 = vmatpush1.msra.mxu0 %v36
    %88 = vmatprep.subr.mxu0 0.0
    %89 = vmatpush1.msra.mxu0 %v35
    %90 = vmatprep.subr.mxu0 0.0
    %91 = vmatpush2.msra.mxu0 0.0
    %92 = vmatprep.subr.mxu0 0.0
    %93 = vmatpush2.msra.mxu0 0.0
    %94 = vmatprep.subr.mxu0 0.0
    %95 = vmatpush2.msra.mxu0 0.0
    %96 = vmatprep.subr.mxu0 0.0
    %97 = vmatpush2.msra.mxu0 0.0
    %98 = vmatprep.subr.mxu0 0.0
    %99 = vmatpush2.msra.mxu0 0.0
    %100 = vmatprep.subr.mxu0 0.0
    %101 = vmatpush2.msra.mxu0 0.0
    %102 = vmatprep.subr.mxu0 0.0
    %103 = vmatpush2.msra.mxu0 0.0
    %104 = vmatprep.subr.mxu0 0.0
    %105 = vmatpush2.msra.mxu0 0.0
    %106 = vmatprep.subr.mxu0 0.0
    %107 = vmatpush2.msra.mxu0 0.0
    %108 = vmatprep.subr.mxu0 0.0
    %109 = vmatpush2.msra.mxu0 0.0
    %110 = vmatprep.subr.mxu0 0.0
    %111 = vmatpush2.msra.mxu0 0.0
    %112 = vmatprep.subr.mxu0 0.0
    %113 = vmatpush2.msra.mxu0 0.0
    %114 = vmatprep.subr.mxu0 0.0
    %115 = vmatpush2.msra.mxu0 0.0
    %116 = vmatprep.subr.mxu0 0.0
    %117 = vmatpush2.msra.mxu0 0.0
    %118 = vmatprep.subr.mxu0 0.0
    %119 = vmatpush2.msra.mxu0 0.0
    %120 = vmatprep.subr.mxu0 0.0
    %121 = vmatpush2.msra.mxu0 0.0
    %122 = vmatprep.mubr.f32.mxu0 0.0
    %123 = vmatmul.mubr.f32.gmra.mxu0 %v34
    %v124 = vpop.f32.mrf.mxu0
    %v125 = vadd.f32 %v56, %v124
    %v126 = vpop.f32.mrf.mxu0
    %127 = vdwg.mxu0
    %v128 = vmax.f32 %v125, 0.0
    %v129 = vld [vmem:[#allocation2] sm:$0xff]
    %v130 = vld [vmem:[#allocation2 + $0x8] sm:$0xff]
    %v131 = vld [vmem:[#allocation2 + $0x10] sm:$0xff]
    %v132 = vld [vmem:[#allocation2 + $0x18] sm:$0xff]
    %v133 = vld [vmem:[#allocation2 + $0x20] sm:$0xff]
    %v134 = vld [vmem:[#allocation2 + $0x28] sm:$0xff]
    %v135 = vld [vmem:[#allocation2 + $0x30] sm:$0xff]
    %v136 = vld [vmem:[#allocation2 + $0x38] sm:$0xff]
    %v137 = vld [vmem:[#allocation2 + $0x40] sm:$0xff]
    %v138 = vld [vmem:[#allocation2 + $0x48] sm:$0xff]
    %v139 = vld [vmem:[#allocation2 + $0x50] sm:$0xff]
    %v140 = vld [vmem:[#allocation2 + $0x58] sm:$0xff]
    %v141 = vld [vmem:[#allocation2 + $0x60] sm:$0xff]
    %v142 = vld [vmem:[#allocation2 + $0x68] sm:$0xff]
    %v143 = vld [vmem:[#allocation2 + $0x70] sm:$0xff]
    %v144 = vld [vmem:[#allocation2 + $0x78] sm:$0xff]
    %v145 = vld [vmem:[%s4] sm:$0x1]
    %v147 = vlaneseq
    %v148 = vshrl.u32 %v147, 7
    %v149 = vsub.s32 0, %v148
    %v150 = vrot.slane %v145, %v149
    %152 = vmatprep.subr.mxu0 0.0
    %153 = vmatpush1.msra.mxu0 %v144
    %154 = vmatprep.subr.mxu0 0.0
    %155 = vmatpush1.msra.mxu0 %v143
    %156 = vmatprep.subr.mxu0 0.0
    %157 = vmatpush1.msra.mxu0 %v142
    %158 = vmatprep.subr.mxu0 0.0
    %159 = vmatpush1.msra.mxu0 %v141
    %160 = vmatprep.subr.mxu0 0.0
    %161 = vmatpush1.msra.mxu0 %v140
    %162 = vmatprep.subr.mxu0 0.0
    %163 = vmatpush1.msra.mxu0 %v139
    %164 = vmatprep.subr.mxu0 0.0
    %165 = vmatpush1.msra.mxu0 %v138
    %166 = vmatprep.subr.mxu0 0.0
    %167 = vmatpush1.msra.mxu0 %v137
    %168 = vmatprep.subr.mxu0 0.0
    %169 = vmatpush1.msra.mxu0 %v136
    %170 = vmatprep.subr.mxu0 0.0
    %171 = vmatpush1.msra.mxu0 %v135
    %172 = vmatprep.subr.mxu0 0.0
    %173 = vmatpush1.msra.mxu0 %v134
    %174 = vmatprep.subr.mxu0 0.0
    %175 = vmatpush1.msra.mxu0 %v133
    %176 = vmatprep.subr.mxu0 0.0
    %177 = vmatpush1.msra.mxu0 %v132
    %178 = vmatprep.subr.mxu0 0.0
    %179 = vmatpush1.msra.mxu0 %v131
    %180 = vmatprep.subr.mxu0 0.0
    %181 = vmatpush1.msra.mxu0 %v130
    %182 = vmatprep.subr.mxu0 0.0
    %183 = vmatpush1.msra.mxu0 %v129
    %184 = vmatprep.subr.mxu0 0.0
    %185 = vmatpush2.msra.mxu0 0.0
    %186 = vmatprep.subr.mxu0 0.0
    %187 = vmatpush2.msra.mxu0 0.0
    %188 = vmatprep.subr.mxu0 0.0
    %189 = vmatpush2.msra.mxu0 0.0
    %190 = vmatprep.subr.mxu0 0.0
    %191 = vmatpush2.msra.mxu0 0.0
    %192 = vmatprep.subr.mxu0 0.0
    %193 = vmatpush2.msra.mxu0 0.0
    %194 = vmatprep.subr.mxu0 0.0
    %195 = vmatpush2.msra.mxu0 0.0
    %196 = vmatprep.subr.mxu0 0.0
    %197 = vmatpush2.msra.mxu0 0.0
    %198 = vmatprep.subr.mxu0 0.0
    %199 = vmatpush2.msra.mxu0 0.0
    %200 = vmatprep.subr.mxu0 0.0
    %201 = vmatpush2.msra.mxu0 0.0
    %202 = vmatprep.subr.mxu0 0.0
    %203 = vmatpush2.msra.mxu0 0.0
    %204 = vmatprep.subr.mxu0 0.0
    %205 = vmatpush2.msra.mxu0 0.0
    %206 = vmatprep.subr.mxu0 0.0
    %207 = vmatpush2.msra.mxu0 0.0
    %208 = vmatprep.subr.mxu0 0.0
    %209 = vmatpush2.msra.mxu0 0.0
    %210 = vmatprep.subr.mxu0 0.0
    %211 = vmatpush2.msra.mxu0 0.0
    %212 = vmatprep.subr.mxu0 0.0
    %213 = vmatpush2.msra.mxu0 0.0
    %214 = vmatprep.subr.mxu0 0.0
    %215 = vmatpush2.msra.mxu0 0.0
    %216 = vmatprep.mubr.f32.mxu0 0.0
    %217 = vmatmul.mubr.f32.gmra.mxu0 %v128
    %v218 = vpop.f32.mrf.mxu0
    %v219 = vadd.f32 %v150, %v218
    %v220 = vpop.f32.mrf.mxu0
    %221 = vdwg.mxu0
    %222 = vst [vmem:[%s5] sm:$0xff] %v219
    // Predicated region
    $region26: #{forward.1} parent=1 // pred_check
      _
    $region27: #{forward.1} parent=1 // pred_check_branch
      %224 = sbr.rel (0) target = $region29
    $region28: #{forward.1} parent=1 // pred_region
      _
    $region29: #{forward.1} parent=1 // pred_fallthru
      _
    // Predicated region
    $region30: #{forward.1} parent=1 // pred_check
      _
    $region31: #{forward.1} parent=1 // pred_check_branch
      %226 = sbr.rel (0) target = $region33
    $region32: #{forward.1} parent=1 // pred_region
      _
    $region33: #{forward.1} parent=1 // pred_fallthru
      _
    %227 = vsyncpa [#allocation3], 1

</llo_original>
